<compile_context>
chip_gen: v7x
topology: tpu7x:2x2x1
jax: 0.10.0
libtpu: 0.0.40
codegen_flags: <defaults>
</compile_context>

<pallas_src>
import functools

import jax
import jax.numpy as jnp
import numpy as np
from jax.experimental import pallas as pl
from jax.experimental.pallas import tpu as pltpu


def _loss_kernel(pred_ref, label_ref, out_ref, *, total_b, block_b, need_mask):
    i = pl.program_id(0)

    p = pred_ref[...].astype(jnp.float32)   # (TB, C)
    y = label_ref[...].astype(jnp.float32)  # (TB, C), assumed binary {0,1}
    tb, c = p.shape

    if need_mask:
        # Grid uses cdiv: the last block may read padded/garbage rows.  Sanitize the
        # inputs (select, not multiply, so inf/nan garbage cannot leak through exp).
        row_ids = i * block_b + jax.lax.broadcasted_iota(jnp.int32, (tb, 1), 0)
        valid = row_ids < total_b                                  # (TB, 1) bool
        p = jnp.where(valid, p, 0.0)
        y = jnp.where(valid, y, 0.0)
    else:
        valid = None

    is_pos = y > 0.0
    pos_f = is_pos.astype(jnp.float32)
    n_pos = jnp.sum(pos_f, axis=1, keepdims=True)                  # (TB, 1)
    n_zero = jnp.float32(c) - n_pos                                # binary labels

    # ---- MultiLabelSoftMarginLoss (reduction='mean') --------------------------
    # per-element:  y*softplus(-p) + (1-y)*softplus(p) = log(1+exp(-|p|)) + relu(p) - y*p
    e = jnp.exp(-jnp.abs(p))                                       # shared EUP op
    log_term = jnp.log(1.0 + e)                                    # e in (0,1]: stable
    mlsm_elem = log_term + jnp.maximum(p, 0.0) - y * p
    mlsm_rows = jnp.sum(mlsm_elem, axis=1, keepdims=True) / jnp.float32(c)   # (TB, 1)

    # ---- CorrelationLoss (summed over rows), factorized + max-shifted (exact) ---
    # m = max over zero-labeled logits (0 if the row has no zeros).
    m = jnp.max(jnp.where(is_pos, -jnp.inf, p), axis=1, keepdims=True)
    m = jnp.where(n_zero == 0.0, 0.0, m)

    # One full-tile exp serves both masked sums:
    #   positives need exp(m - p_k), zeros need exp(p_l - m)  (<= 1, never overflows)
    t = jnp.where(is_pos, m - p, p - m)
    et = jnp.exp(t)
    s_pos = jnp.sum(jnp.where(is_pos, et, 0.0), axis=1, keepdims=True)
    s_zero = jnp.sum(jnp.where(is_pos, 0.0, et), axis=1, keepdims=True)

    both = s_pos * s_zero / jnp.maximum(n_pos * n_zero, 1.0)       # shift cancels exactly
    only_zero = s_zero * jnp.exp(m - 1.0) / jnp.maximum(n_zero, 1.0)   # row has no positives
    only_one = s_pos / jnp.maximum(n_pos, 1.0)                         # row has no zeros (m==0)

    corr_rows = jnp.where(n_pos == 0.0, only_zero,
                          jnp.where(n_zero == 0.0, only_one, both))    # (TB, 1)

    if need_mask:
        mlsm_rows = jnp.where(valid, mlsm_rows, 0.0)
        corr_rows = jnp.where(valid, corr_rows, 0.0)

    mlsm_part = jnp.sum(mlsm_rows, axis=0, keepdims=True) / jnp.float32(total_b)  # (1,1)
    corr_part = jnp.sum(corr_rows, axis=0, keepdims=True)                         # (1,1)

    # Per-block partial (no cross-step accumulator) -> grid axis can run "parallel".
    out_ref[0] = (mlsm_part + corr_part).astype(out_ref.dtype)


def correlation_mlsm_loss(pred, label, block_b=None):
    assert pred.ndim == 2 and pred.shape == label.shape
    b, c = pred.shape

    if block_b is None:
        # ~1 MiB per input tile (x 2 inputs x 2 pipeline buffers + temporaries stays
        # well under the 16 MiB scoped-VMEM default on v5e and 64 MiB physical on v7x).
        itemsize = max(jnp.dtype(pred.dtype).itemsize, jnp.dtype(label.dtype).itemsize)
        target = max(1, (1 << 20) // max(1, c * itemsize))
        if target >= b:
            block_b = b
        else:
            block_b = max(32, (target // 32) * 32)   # multiple of 32: safe for any dtype tiling
            if block_b >= b:
                block_b = b

    grid_n = pl.cdiv(b, block_b)
    need_mask = (b % block_b) != 0

    partials = pl.pallas_call(
        functools.partial(_loss_kernel, total_b=b, block_b=block_b, need_mask=need_mask),
        out_shape=jax.ShapeDtypeStruct((grid_n, 1, 1), jnp.float32),
        grid=(grid_n,),
        in_specs=[
            pl.BlockSpec((block_b, c), lambda i: (i, 0)),
            pl.BlockSpec((block_b, c), lambda i: (i, 0)),
        ],
        # Leading (unconstrained) grid dim carries the per-block partials; the last
        # two block dims equal the full array dims, so no (8,128) tiling issue.
        out_specs=pl.BlockSpec((1, 1, 1), lambda i: (i, 0, 0)),
        compiler_params=pltpu.CompilerParams(
            dimension_semantics=("parallel",),          # lets v7x use both TensorCores
            vmem_limit_bytes=32 * 1024 * 1024,
        ),
    )(pred, label)
    return jnp.sum(partials)


def _reference_loss(pred, label):
    """Pure-numpy transliteration of the PyTorch module (for validation)."""
    pred = np.asarray(pred, np.float64)
    label = np.asarray(label, np.float64)
    b, c = pred.shape

    def logsig(x):
        return -np.logaddexp(0.0, -x)

    mlsm = np.mean([
        -np.mean(label[i] * logsig(pred[i]) + (1.0 - label[i]) * logsig(-pred[i]))
        for i in range(b)
    ])

    total = 0.0
    for i in range(b):
        n_one = int(np.sum(label[i]))
        n_zero = c - n_one
        zero_idx = np.nonzero(label[i] == 0)[0]
        nz_idx = np.nonzero(label[i] > 0)[0]
        loss = 0.0
        if n_one == 0:
            for l in zero_idx:
                loss += np.exp(pred[i][l] - 1.0)
            loss /= n_zero
        elif n_zero == 0:
            for k in nz_idx:
                loss += np.exp(-pred[i][k])
            loss /= n_one
        else:
            for k in nz_idx:
                for l in zero_idx:
                    loss += np.exp(-(pred[i][k] - pred[i][l]))
            loss /= n_one * n_zero
        total += loss
    return mlsm + total


if __name__ == "__main__":
    # Case 1: tiny single-block problem (pred/label are (batch, num_classes)).
    B, C = 2, 16
    kp, kl = jax.random.split(jax.random.PRNGKey(0))
    pred = jax.random.normal(kp, (B, C), dtype=jnp.float32)
    label = jax.random.bernoulli(kl, p=0.5, shape=(B, C)).astype(jnp.float32)

    out = jax.block_until_ready(correlation_mlsm_loss(pred, label))
    ref = _reference_loss(np.asarray(pred), np.asarray(label))
    assert np.isfinite(float(out))
    assert np.allclose(float(out), ref, rtol=1e-4, atol=1e-5), (float(out), ref)

    # Case 2: multi-block parallel grid with a ragged edge (20 rows, block_b=8 -> 3 blocks,
    # padded rows masked in-kernel) and rows hitting the all-zero / all-one branches.
    B2, C2 = 20, 16
    kp2, kl2 = jax.random.split(jax.random.PRNGKey(0))
    pred2 = jax.random.normal(kp2, (B2, C2), dtype=jnp.float32)
    label2 = jax.random.bernoulli(kl2, p=0.5, shape=(B2, C2)).astype(jnp.float32)
    label2 = label2.at[0].set(0.0)   # all-zero labels -> exp(p - 1) branch
    label2 = label2.at[1].set(1.0)   # all-one labels  -> exp(-p) branch

    out2 = jax.block_until_ready(correlation_mlsm_loss(pred2, label2, block_b=8))
    ref2 = _reference_loss(np.asarray(pred2), np.asarray(label2))
    assert np.isfinite(float(out2))
    assert np.allclose(float(out2), ref2, rtol=1e-4, atol=1e-5), (float(out2), ref2)

    print("KERNEL_OK")
</pallas_src>

<mosaic_0001>
module attributes {stable_mosaic.version = 11 : i64} {
  func.func @_loss_kernel(%arg0: i32, %arg1: memref<2x16xf32, #tpu.memory_space<vmem>>, %arg2: memref<2x16xf32, #tpu.memory_space<vmem>>, %arg3: memref<1x1x1xf32, #tpu.memory_space<vmem>>) attributes {dimension_semantics = [#tpu.dimension_semantics<parallel>], iteration_bounds = array<i64: 1>, scalar_prefetch = 0 : i64, scratch_operands = 0 : i64, tpu.core_type = #tpu.core_type<tc>, window_params = [{transform_indices = @transform_0, window_bounds = array<i64: 2, 16>}, {transform_indices = @transform_1, window_bounds = array<i64: 2, 16>}, {transform_indices = @transform_2, window_bounds = array<i64: 1, 1, 1>}]} {
    %c0 = arith.constant 0 : index
    %c0_0 = arith.constant 0 : index
    %0 = vector.load %arg1[%c0, %c0_0] : memref<2x16xf32, #tpu.memory_space<vmem>>, vector<2x16xf32>
    %c0_1 = arith.constant 0 : index
    %c0_2 = arith.constant 0 : index
    %1 = vector.load %arg2[%c0_1, %c0_2] : memref<2x16xf32, #tpu.memory_space<vmem>>, vector<2x16xf32>
    %cst = arith.constant 0.000000e+00 : f32
    %2 = vector.broadcast %cst : f32 to vector<2x16xf32>
    %3 = arith.cmpf ogt, %1, %2 : vector<2x16xf32>
    %4 = arith.extui %3 : vector<2x16xi1> to vector<2x16xi32>
    %5 = arith.sitofp %4 : vector<2x16xi32> to vector<2x16xf32>
    %cst_3 = arith.constant dense<0.000000e+00> : vector<2xf32>
    %6 = vector.multi_reduction <add>, %5, %cst_3 [1] : vector<2x16xf32> to vector<2xf32>
    %7 = vector.shape_cast %6 : vector<2xf32> to vector<2x1xf32>
    %cst_4 = arith.constant 1.600000e+01 : f32
    %8 = vector.broadcast %cst_4 : f32 to vector<2x1xf32>
    %9 = arith.subf %8, %7 : vector<2x1xf32>
    %10 = math.absf %0 : vector<2x16xf32>
    %cst_5 = arith.constant 0.000000e+00 : f32
    %11 = vector.broadcast %cst_5 : f32 to vector<2x16xf32>
    %12 = arith.subf %11, %10 : vector<2x16xf32>
    %13 = math.exp %12 : vector<2x16xf32>
    %cst_6 = arith.constant 1.000000e+00 : f32
    %14 = vector.broadcast %cst_6 : f32 to vector<2x16xf32>
    %15 = arith.addf %14, %13 : vector<2x16xf32>
    %16 = math.log %15 : vector<2x16xf32>
    %cst_7 = arith.constant 0.000000e+00 : f32
    %17 = vector.broadcast %cst_7 : f32 to vector<2x16xf32>
    %18 = arith.maximumf %0, %17 : vector<2x16xf32>
    %19 = arith.addf %16, %18 : vector<2x16xf32>
    %20 = arith.mulf %1, %0 : vector<2x16xf32>
    %21 = arith.subf %19, %20 : vector<2x16xf32>
    %cst_8 = arith.constant dense<0.000000e+00> : vector<2xf32>
    %22 = vector.multi_reduction <add>, %21, %cst_8 [1] : vector<2x16xf32> to vector<2xf32>
    %23 = vector.shape_cast %22 : vector<2xf32> to vector<2x1xf32>
    %cst_9 = arith.constant 1.600000e+01 : f32
    %24 = vector.broadcast %cst_9 : f32 to vector<2x1xf32>
    %25 = arith.divf %23, %24 : vector<2x1xf32>
    %cst_10 = arith.constant 0xFF800000 : f32
    %26 = vector.broadcast %cst_10 : f32 to vector<2x16xf32>
    %27 = arith.select %3, %26, %0 : vector<2x16xi1>, vector<2x16xf32>
    %cst_11 = arith.constant dense<0xFF800000> : vector<2xf32>
    %28 = vector.multi_reduction <maximumf>, %27, %cst_11 [1] : vector<2x16xf32> to vector<2xf32>
    %29 = vector.shape_cast %28 : vector<2xf32> to vector<2x1xf32>
    %cst_12 = arith.constant 0.000000e+00 : f32
    %30 = vector.broadcast %cst_12 : f32 to vector<2x1xf32>
    %31 = arith.cmpf oeq, %9, %30 : vector<2x1xf32>
    %cst_13 = arith.constant 0.000000e+00 : f32
    %32 = vector.broadcast %cst_13 : f32 to vector<2x1xf32>
    %33 = arith.select %31, %32, %29 : vector<2x1xi1>, vector<2x1xf32>
    %34 = vector.broadcast %33 : vector<2x1xf32> to vector<2x16xf32>
    %35 = arith.subf %34, %0 : vector<2x16xf32>
    %36 = vector.broadcast %33 : vector<2x1xf32> to vector<2x16xf32>
    %37 = arith.subf %0, %36 : vector<2x16xf32>
    %38 = arith.select %3, %35, %37 : vector<2x16xi1>, vector<2x16xf32>
    %39 = math.exp %38 : vector<2x16xf32>
    %cst_14 = arith.constant 0.000000e+00 : f32
    %40 = vector.broadcast %cst_14 : f32 to vector<2x16xf32>
    %41 = arith.select %3, %39, %40 : vector<2x16xi1>, vector<2x16xf32>
    %cst_15 = arith.constant dense<0.000000e+00> : vector<2xf32>
    %42 = vector.multi_reduction <add>, %41, %cst_15 [1] : vector<2x16xf32> to vector<2xf32>
    %43 = vector.shape_cast %42 : vector<2xf32> to vector<2x1xf32>
    %cst_16 = arith.constant 0.000000e+00 : f32
    %44 = vector.broadcast %cst_16 : f32 to vector<2x16xf32>
    %45 = arith.select %3, %44, %39 : vector<2x16xi1>, vector<2x16xf32>
    %cst_17 = arith.constant dense<0.000000e+00> : vector<2xf32>
    %46 = vector.multi_reduction <add>, %45, %cst_17 [1] : vector<2x16xf32> to vector<2xf32>
    %47 = vector.shape_cast %46 : vector<2xf32> to vector<2x1xf32>
    %48 = arith.mulf %43, %47 : vector<2x1xf32>
    %49 = arith.mulf %7, %9 : vector<2x1xf32>
    %cst_18 = arith.constant 1.000000e+00 : f32
    %50 = vector.broadcast %cst_18 : f32 to vector<2x1xf32>
    %51 = arith.maximumf %49, %50 : vector<2x1xf32>
    %52 = arith.divf %48, %51 : vector<2x1xf32>
    %cst_19 = arith.constant 1.000000e+00 : f32
    %53 = vector.broadcast %cst_19 : f32 to vector<2x1xf32>
    %54 = arith.subf %33, %53 : vector<2x1xf32>
    %55 = math.exp %54 : vector<2x1xf32>
    %56 = arith.mulf %47, %55 : vector<2x1xf32>
    %cst_20 = arith.constant 1.000000e+00 : f32
    %57 = vector.broadcast %cst_20 : f32 to vector<2x1xf32>
    %58 = arith.maximumf %9, %57 : vector<2x1xf32>
    %59 = arith.divf %56, %58 : vector<2x1xf32>
    %cst_21 = arith.constant 1.000000e+00 : f32
    %60 = vector.broadcast %cst_21 : f32 to vector<2x1xf32>
    %61 = arith.maximumf %7, %60 : vector<2x1xf32>
    %62 = arith.divf %43, %61 : vector<2x1xf32>
    %cst_22 = arith.constant 0.000000e+00 : f32
    %63 = vector.broadcast %cst_22 : f32 to vector<2x1xf32>
    %64 = arith.cmpf oeq, %7, %63 : vector<2x1xf32>
    %cst_23 = arith.constant 0.000000e+00 : f32
    %65 = vector.broadcast %cst_23 : f32 to vector<2x1xf32>
    %66 = arith.cmpf oeq, %9, %65 : vector<2x1xf32>
    %67 = arith.select %66, %62, %52 : vector<2x1xi1>, vector<2x1xf32>
    %68 = arith.select %64, %59, %67 : vector<2x1xi1>, vector<2x1xf32>
    %cst_24 = arith.constant dense<0.000000e+00> : vector<1xf32>
    %69 = vector.multi_reduction <add>, %25, %cst_24 [0] : vector<2x1xf32> to vector<1xf32>
    %70 = vector.shape_cast %69 : vector<1xf32> to vector<1x1xf32>
    %cst_25 = arith.constant 2.000000e+00 : f32
    %71 = vector.broadcast %cst_25 : f32 to vector<1x1xf32>
    %72 = arith.divf %70, %71 : vector<1x1xf32>
    %cst_26 = arith.constant dense<0.000000e+00> : vector<1xf32>
    %73 = vector.multi_reduction <add>, %68, %cst_26 [0] : vector<2x1xf32> to vector<1xf32>
    %74 = vector.shape_cast %73 : vector<1xf32> to vector<1x1xf32>
    %75 = arith.addf %72, %74 : vector<1x1xf32>
    %c0_27 = arith.constant 0 : index
    %c0_28 = arith.constant 0 : index
    %c0_29 = arith.constant 0 : index
    %76 = vector.load %arg3[%c0_27, %c0_28, %c0_29] : memref<1x1x1xf32, #tpu.memory_space<vmem>>, vector<1x1x1xf32>
    %77 = vector.shape_cast %76 : vector<1x1x1xf32> to vector<1x1xf32>
    %78 = vector.shape_cast %75 : vector<1x1xf32> to vector<1x1x1xf32>
    tpu.vector_store %arg3[%c0_27, %c0_28, %c0_29], %78 {strides = array<i32>} : memref<1x1x1xf32, #tpu.memory_space<vmem>>, vector<1x1x1xf32>,
    return
  }
  func.func @transform_0(%arg0: i32) -> (i32, i32) {
    %c0_i32 = arith.constant 0 : i32
    %c0_i32_0 = arith.constant 0 : i32
    return %arg0, %c0_i32 : i32, i32
  }
  func.func @transform_1(%arg0: i32) -> (i32, i32) {
    %c0_i32 = arith.constant 0 : i32
    %c0_i32_0 = arith.constant 0 : i32
    return %arg0, %c0_i32 : i32, i32
  }
  func.func @transform_2(%arg0: i32) -> (i32, i32, i32) {
    %c0_i32 = arith.constant 0 : i32
    %c0_i32_0 = arith.constant 0 : i32
    %c0_i32_1 = arith.constant 0 : i32
    return %arg0, %c0_i32, %c0_i32_0 : i32, i32, i32
  }
}

</mosaic_0001>

<llo_original>
// kernel: tpu_custom_call.1
$region0: #{tpu_custom_call.1}
  #allocation0 [shape = 'u32[]', space=smem, size = 0x4, offset = 0x4, fixed_abs, tag = 'smem constant byte address 0x4 - core index']
  #allocation1 [shape = 'u32[144,128]{1,0:T(1,128)}', space=vmem, size = 0x12000, scoped, tag = 'internal scratch']
  %s0 = inlined_call_operand.hbm [shape: f32[2,16], index: 0, kind: input, shape index: {}]
  %s1 = inlined_call_operand.vmem [shape: f32[2,16], index: 1, kind: input, shape index: {}]
  %s2 = inlined_call_operand.hbm [shape: f32[1,1,1], index: 2, kind: output, shape index: {}]
  %s3 = sld [smem:[#allocation0]]
  $region22: #{tpu_custom_call.1} parent=0
    _
  %s5 = ssub.s32 1, %s3
  %s6 = scalar_select 0, %s5, %s3
  $region1: #{tpu_custom_call.1} parent=0
    #allocation2 [shape = 'u8[1024]{0}', space=vmem, size = 0x400, scoped, tag = 'input window, operand 0, single buffered']
    #allocation3 [shape = 's32[1]{0}', space=sflag, size = 0x4, scoped, tag = 'scoped memory for tpu_custom_call.1']
    #allocation4 [shape = 's32[1]{0}', space=sflag, size = 0x4, scoped, tag = 'scoped memory for tpu_custom_call.1']
    #allocation5 [shape = 'u8[512]{0}', space=vmem, size = 0x400, scoped, tag = 'output window, operand 0, single buffered']
    %7 = vsyncpa [#allocation3], 0
    %8 = vsyncpa [#allocation4], 0
    // Predicated region
    $region2: #{tpu_custom_call.1} parent=1 // pred_check
      _
    $region3: #{tpu_custom_call.1} parent=1 // pred_check_branch
      %10 = sbr.rel (0) target = $region5
    $region4: #{tpu_custom_call.1} parent=1 // pred_region
      %s12 = ssub.s32 32, 32
      %13 = vsyncadd [#allocation3], %s12
      %s15 = sshll.u32 [#allocation2], 4
      %s16 = int_to_ptr.vmem [resolvable:$true] %s15
      %18 = dma.hbm_to_vmem [thread:$0]  %s0, 32, %s16, [#allocation3]
    $region5: #{tpu_custom_call.1} parent=1 // pred_fallthru
      _
    // Predicated region
    $region6: #{tpu_custom_call.1} parent=1 // pred_check
      _
    $region7: #{tpu_custom_call.1} parent=1 // pred_check_branch
      %20 = sbr.rel (0) target = $region9
    $region8: #{tpu_custom_call.1} parent=1 // pred_region
      _
    $region9: #{tpu_custom_call.1} parent=1 // pred_fallthru
      _
    // Predicated region
    $region10: #{tpu_custom_call.1} parent=1 // pred_check
      _
    $region11: #{tpu_custom_call.1} parent=1 // pred_check_branch
      %22 = sbr.rel (0) target = $region13
    $region12: #{tpu_custom_call.1} parent=1 // pred_region
      %23 = dma.done [#allocation3], 32
    $region13: #{tpu_custom_call.1} parent=1 // pred_fallthru
      _
    %v24 = vld [vmem:[#allocation2] sm:$0x3]
    %v25 = vld [vmem:[%s1] sm:$0x3]
    %vm26 = vcmp.gt.f32.partialorder %v25, 0.0
    %v27 = vsel %vm26, 1, 0
    %v28 = vcvt.s32.f32 %v27
    %vm29 = vcmask 123904
    %v30 = vsel %vm29, %v28, 0.0
    %31 = vadd.xlane.f32.xlu0 %v30
    %v32 = vpop.xlane.xlu0 %31
    %v33 = vsub.f32 16.0, %v32
    %v34 = vand.u32 2147483647, %v24
    %v35 = vsub.f32 0.0, %v34
    %v36 = vmul.f32 %v35, 1.442695
    %v37 = vpow.pop %v36
    %v38 = vadd.f32 %v37, 1.0
    %v39 = vlog2.pop %v38
    %v40 = vmul.f32 %v39, 0.6931472
    %v41 = vmax.f32 %v24, 0.0
    %v42 = vadd.f32 %v40, %v41
    %v43 = vmul.f32 %v25, %v24
    %v44 = vsub.f32 %v42, %v43
    %v45 = vsel %vm29, %v44, 0.0
    %46 = vadd.xlane.f32.xlu0 %v45
    %v47 = vpop.xlane.xlu0 %46
    %v48 = vrcp.pop 16.0
    %v49 = vmul.f32 %v47, %v48
    %v50 = vsel %vm26, -inf, %v24
    %v51 = vsel %vm29, %v50, -inf
    %52 = vmax.xlane.f32.xlu0 %v51
    %v53 = vpop.xlane.xlu0 %52
    %vm54 = vcmp.eq.f32.partialorder %v33, 0.0
    %v55 = vsel %vm54, 0.0, %v53
    %v56 = vsub.f32 %v55, %v24
    %v57 = vsub.f32 %v24, %v55
    %v58 = vsel %vm26, %v56, %v57
    %v59 = vmul.f32 %v58, 1.442695
    %v60 = vpow.pop %v59
    %v61 = vsel %vm26, %v60, 0.0
    %v62 = vsel %vm29, %v61, 0.0
    %63 = vadd.xlane.f32.xlu0 %v62
    %v64 = vpop.xlane.xlu0 %63
    %v65 = vsel %vm26, 0.0, %v60
    %v66 = vsel %vm29, %v65, 0.0
    %67 = vadd.xlane.f32.xlu0 %v66
    %v68 = vpop.xlane.xlu0 %67
    %v69 = vmul.f32 %v64, %v68
    %v70 = vmul.f32 %v32, %v33
    %v71 = vmax.f32 %v70, 1.0
    %v72 = vrcp.pop %v71
    %v73 = vmul.f32 %v69, %v72
    %v74 = vsub.f32 %v55, 1.0
    %v75 = vmul.f32 %v74, 1.442695
    %v76 = vpow.pop %v75
    %v77 = vmul.f32 %v68, %v76
    %v78 = vmax.f32 %v33, 1.0
    %v79 = vrcp.pop %v78
    %v80 = vmul.f32 %v77, %v79
    %v81 = vmax.f32 %v32, 1.0
    %v82 = vrcp.pop %v81
    %v83 = vmul.f32 %v64, %v82
    %vm84 = vcmp.eq.f32.partialorder %v32, 0.0
    %v85 = vsel %vm54, %v83, %v73
    %v86 = vsel %vm84, %v80, %v85
    %vm87 = vcmask 1041408
    %v88 = vsel %vm87, %v49, 0.0
    %v89 = vrot.slane %v88, 4
    %v90 = vadd.f32 %v88, %v89
    %v91 = vrot.slane %v90, 2
    %v92 = vadd.f32 %v90, %v91
    %v93 = vrot.slane %v92, 1
    %v94 = vadd.f32 %v92, %v93
    %v95 = vrcp.pop 2.0
    %v96 = vmul.f32 %v94, %v95
    %v97 = vsel %vm87, %v86, 0.0
    %v98 = vrot.slane %v97, 4
    %v99 = vadd.f32 %v97, %v98
    %v100 = vrot.slane %v99, 2
    %v101 = vadd.f32 %v99, %v100
    %v102 = vrot.slane %v101, 1
    %v103 = vadd.f32 %v101, %v102
    %v104 = vadd.f32 %v96, %v103
    %vm105 = vcmask 0
    %106 = vst.msk [vmem:[#allocation5] sm:$0x1] %vm105, %v104
    // Predicated region
    $region14: #{tpu_custom_call.1} parent=1 // pred_check
      _
    $region15: #{tpu_custom_call.1} parent=1 // pred_check_branch
      %108 = sbr.rel (0) target = $region17
    $region16: #{tpu_custom_call.1} parent=1 // pred_region
      %s110 = ssub.s32 16, 16
      %111 = vsyncadd [#allocation4], %s110
      %s113 = sshll.u32 [#allocation5], 4
      %s114 = int_to_ptr.vmem [resolvable:$true] %s113
      %116 = dma.vmem_to_hbm [thread:$0]  %s114, 16, %s2, [#allocation4]
    $region17: #{tpu_custom_call.1} parent=1 // pred_fallthru
      _
    // Predicated region
    $region18: #{tpu_custom_call.1} parent=1 // pred_check
      _
    $region19: #{tpu_custom_call.1} parent=1 // pred_check_branch
      %118 = sbr.rel (0) target = $region21
    $region20: #{tpu_custom_call.1} parent=1 // pred_region
      %119 = dma.done [#allocation4], 16
    $region21: #{tpu_custom_call.1} parent=1 // pred_fallthru
      _
    %120 = vsyncpa [#allocation3], 1
    %121 = vsyncpa [#allocation4], 1

</llo_original>
